<compile_context>
chip_gen: v5e
topology: v5e:2x2
jax: 0.10.0
libtpu: 0.0.40
codegen_flags: <defaults>
</compile_context>

<pallas_src>
import jax
import jax.numpy as jnp
from jax.experimental import pallas as pl
from jax.experimental.pallas import tpu as pltpu


def _proj_kernel(x_ref, w_ref, b_ref, o_ref):
    """o[:, 0, :] = x @ W (bf16 operands, f32 MXU accumulation) + bias."""
    x = x_ref[...].astype(jnp.bfloat16)                     # in-kernel cast: free (VALU slack)
    acc = jnp.dot(x, w_ref[...], preferred_element_type=jnp.float32)
    o_ref[:, 0, :] = (acc + b_ref[...]).astype(o_ref.dtype)


def prompt_projection_pallas(text_embeddings, weight_kn_bf16, bias2d):
    """
    text_embeddings: (B, K) float32   -- output of CLIP encode_text (K=512)
    weight_kn_bf16:  (K, N) bfloat16  -- nn.Linear(512, N).weight.T, pre-cast once
    bias2d:          (1, N) float32   -- nn.Linear bias, pre-reshaped once
    returns:         (B, 1, N) float32  (matches .unsqueeze(1))
    """
    B, K = text_embeddings.shape
    K2, N = weight_kn_bf16.shape
    assert K == K2
    assert bias2d.shape == (1, N)

    flops = 2 * B * K * N
    bytes_accessed = (
        text_embeddings.size * 4      # x  (f32)
        + weight_kn_bf16.size * 2     # W  (bf16)
        + bias2d.size * 4             # b  (f32)
        + B * N * 4                   # out (f32)
    )

    # Single-shot call: no grid, whole-array VMEM residency (~0.3 MiB total,
    # fits every generation's scoped VMEM trivially), no pipeline prologue.
    return pl.pallas_call(
        _proj_kernel,
        out_shape=jax.ShapeDtypeStruct((B, 1, N), jnp.float32),
        in_specs=[
            pl.BlockSpec(memory_space=pltpu.MemorySpace.VMEM),   # x
            pl.BlockSpec(memory_space=pltpu.MemorySpace.VMEM),   # W
            pl.BlockSpec(memory_space=pltpu.MemorySpace.VMEM),   # bias
        ],
        out_specs=pl.BlockSpec(memory_space=pltpu.MemorySpace.VMEM),
        cost_estimate=pl.CostEstimate(
            flops=flops, transcendentals=0, bytes_accessed=bytes_accessed
        ),
    )(text_embeddings, weight_kn_bf16, bias2d)


def init_params(key, in_dim=512, prompt_embed_dim=256):
    """Deterministic init mimicking nn.Linear(512, prompt_embed_dim).

    Returns the kernel-ready parameters (bf16 (K, N) weight, (1, N) f32 bias)
    plus the original f32 weight (only used for the reference check below).
    """
    kw, kb = jax.random.split(key)
    bound = 1.0 / jnp.sqrt(in_dim)
    # PyTorch stores weight as (out, in); we keep the transposed (in, out) layout.
    w_kn_f32 = jax.random.uniform(
        kw, (in_dim, prompt_embed_dim), jnp.float32, minval=-bound, maxval=bound
    )
    b = jax.random.uniform(
        kb, (prompt_embed_dim,), jnp.float32, minval=-bound, maxval=bound
    )
    w_kn_bf16 = w_kn_f32.astype(jnp.bfloat16)        # cast ONCE; frozen parameter
    bias2d = b.reshape(1, prompt_embed_dim)          # reshape ONCE; lives with the param
    return w_kn_bf16, bias2d, w_kn_f32


if __name__ == "__main__":
    B = 2                     # number of text prompts
    CLIP_DIM = 512            # CLIP text embedding dim (fixed by the module)
    PROMPT_EMBED_DIM = 256    # prompt_embed_dim

    key = jax.random.PRNGKey(0)
    k_emb, k_params = jax.random.split(key)

    # Stand-in for clip_model.encode_text(...).float()  -> (B, 512)
    text_embeddings = jax.random.normal(k_emb, (B, CLIP_DIM), jnp.float32)

    w_bf16, bias2d, w_f32 = init_params(k_params, CLIP_DIM, PROMPT_EMBED_DIM)

    out = prompt_projection_pallas(text_embeddings, w_bf16, bias2d)
    out = jax.block_until_ready(out)

    # Reference 1: identical quantization + MXU path (bf16 operands, f32 acc).
    ref_bf16 = (
        jnp.dot(
            text_embeddings.astype(jnp.bfloat16),
            w_bf16,
            preferred_element_type=jnp.float32,
        )
        + bias2d
    )[:, None, :]
    # Reference 2: full-precision f32 (loose tolerance: bf16 weight quantization).
    ref_f32 = (
        jnp.dot(
            text_embeddings, w_f32,
            preferred_element_type=jnp.float32,
            precision=jax.lax.Precision.HIGHEST,
        )
        + bias2d
    )[:, None, :]

    assert out.shape == (B, 1, PROMPT_EMBED_DIM), out.shape
    assert jnp.allclose(out, ref_bf16, atol=1e-4, rtol=1e-4), "mismatch vs bf16 reference"
    assert jnp.allclose(out, ref_f32, atol=2e-2, rtol=2e-2), "mismatch vs f32 reference"

    print("KERNEL_OK")
</pallas_src>

<mosaic_0001>
module attributes {stable_mosaic.version = 11 : i64} {
  func.func @_proj_kernel(%arg0: memref<2x512xf32, #tpu.memory_space<vmem>>, %arg1: memref<512x256xbf16, #tpu.memory_space<vmem>>, %arg2: memref<1x256xf32, #tpu.memory_space<vmem>>, %arg3: memref<2x1x256xf32, #tpu.memory_space<vmem>>) attributes {dimension_semantics = [], scalar_prefetch = 0 : i64, scratch_operands = 0 : i64, tpu.core_type = #tpu.core_type<tc>} {
    %c0 = arith.constant 0 : index
    %c0_0 = arith.constant 0 : index
    %0 = vector.load %arg0[%c0, %c0_0] : memref<2x512xf32, #tpu.memory_space<vmem>>, vector<2x512xf32>
    %1 = arith.truncf %0 : vector<2x512xf32> to vector<2x512xbf16>
    %c0_1 = arith.constant 0 : index
    %c0_2 = arith.constant 0 : index
    %2 = vector.load %arg1[%c0_1, %c0_2] : memref<512x256xbf16, #tpu.memory_space<vmem>>, vector<512x256xbf16>
    %cst = arith.constant dense<0.000000e+00> : vector<2x256xf32>
    %3 = tpu.matmul %1, %2, %cst {dimension_numbers = #tpu.dot_dimension_numbers<[1], [0], [0], [1], [0, 0, 1, 1], [], []>} : vector<2x512xbf16>, vector<512x256xbf16>, vector<2x256xf32> -> vector<2x256xf32>
    %c0_3 = arith.constant 0 : index
    %c0_4 = arith.constant 0 : index
    %4 = vector.load %arg2[%c0_3, %c0_4] : memref<1x256xf32, #tpu.memory_space<vmem>>, vector<1x256xf32>
    %5 = vector.broadcast %4 : vector<1x256xf32> to vector<2x256xf32>
    %6 = arith.addf %3, %5 : vector<2x256xf32>
    %c0_5 = arith.constant 0 : index
    %c0_6 = arith.constant 0 : index
    %c0_7 = arith.constant 0 : index
    %7 = vector.load %arg3[%c0_5, %c0_6, %c0_7] : memref<2x1x256xf32, #tpu.memory_space<vmem>>, vector<2x1x256xf32>
    %8 = vector.shape_cast %7 : vector<2x1x256xf32> to vector<2x256xf32>
    %9 = vector.shape_cast %6 : vector<2x256xf32> to vector<2x1x256xf32>
    tpu.vector_store %arg3[%c0_5, %c0_6, %c0_7], %9 {strides = array<i32>} : memref<2x1x256xf32, #tpu.memory_space<vmem>>, vector<2x1x256xf32>,
    return
  }
}

</mosaic_0001>

<llo_original>
// kernel: tpu_custom_call.1
$region0: #{tpu_custom_call.1}
  #allocation0 [shape = 'u32[]', space=smem, size = 0x4, offset = 0x4, fixed_abs, tag = 'smem constant byte address 0x4 - core index']
  #allocation1 [shape = 'u32[72,128]{1,0:T(1,128)}', space=vmem, size = 0x9000, scoped, tag = 'internal scratch']
  %s0 = inlined_call_operand.hbm [shape: f32[2,512], index: 0, kind: input, shape index: {}]
  %s1 = inlined_call_operand.hbm [shape: bf16[512,256], index: 1, kind: input, shape index: {}]
  %s2 = inlined_call_operand.hbm [shape: f32[1,256], index: 2, kind: input, shape index: {}]
  %s3 = inlined_call_operand.hbm [shape: f32[2,1,256], index: 3, kind: output, shape index: {}]
  %s4 = sld [smem:[#allocation0]]
  $region34: #{tpu_custom_call.1} parent=0
    _
  %s6 = ssub.s32 1, %s4
  %s7 = scalar_select 0, %s6, %s4
  $region1: #{tpu_custom_call.1} parent=0
    #allocation2 [shape = 'u8[4096]{0}', space=vmem, size = 0x1000, scoped, tag = 'input window, operand 0, single buffered']
    #allocation3 [shape = 's32[1]{0}', space=sflag, size = 0x4, scoped, tag = 'scoped memory for tpu_custom_call.1']
    #allocation4 [shape = 's32[1]{0}', space=sflag, size = 0x4, scoped, tag = 'scoped memory for tpu_custom_call.1']
    #allocation5 [shape = 'u8[262144]{0}', space=vmem, size = 0x40000, scoped, tag = 'input window, operand 1, single buffered']
    #allocation6 [shape = 's32[1]{0}', space=sflag, size = 0x4, scoped, tag = 'scoped memory for tpu_custom_call.1']
    #allocation7 [shape = 'u8[1024]{0}', space=vmem, size = 0x400, scoped, tag = 'input window, operand 2, single buffered']
    #allocation8 [shape = 'u8[2048]{0}', space=vmem, size = 0x800, scoped, tag = 'output window, operand 0, single buffered']
    %8 = vsyncpa [#allocation3], 0
    %9 = vsyncpa [#allocation6], 0
    %10 = vsyncpa [#allocation4], 0
    // Predicated region
    $region2: #{tpu_custom_call.1} parent=1 // pred_check
      _
    $region3: #{tpu_custom_call.1} parent=1 // pred_check_branch
      %12 = sbr.rel (0) target = $region5
    $region4: #{tpu_custom_call.1} parent=1 // pred_region
      %14 = vsyncadd [#allocation3], 0
      %s16 = sshll.u32 %s0, 4
      %s17 = int_to_ptr.hbm [resolvable:$true] %s16
      %s18 = sshll.u32 [#allocation2], 4
      %s19 = int_to_ptr.vmem [resolvable:$true] %s18
      %21 = dma.hbm_to_vmem [thread:$0]  %s17, 128, %s19, [#allocation3]
    $region5: #{tpu_custom_call.1} parent=1 // pred_fallthru
      _
    // Predicated region
    $region6: #{tpu_custom_call.1} parent=1 // pred_check
      _
    $region7: #{tpu_custom_call.1} parent=1 // pred_check_branch
      %23 = sbr.rel (0) target = $region9
    $region8: #{tpu_custom_call.1} parent=1 // pred_region
      %25 = vsyncadd [#allocation6], 0
      %s26 = sshll.u32 %s1, 4
      %s27 = int_to_ptr.hbm [resolvable:$true] %s26
      %s28 = sshll.u32 [#allocation5], 4
      %s29 = int_to_ptr.vmem [resolvable:$true] %s28
      %34 = dma.hbm_to_vmem [thread:$0]  %s27, 8192, %s29, [#allocation6], 128, 128, 8
    $region9: #{tpu_custom_call.1} parent=1 // pred_fallthru
      _
    // Predicated region
    $region10: #{tpu_custom_call.1} parent=1 // pred_check
      _
    $region11: #{tpu_custom_call.1} parent=1 // pred_check_branch
      %36 = sbr.rel (0) target = $region13
    $region12: #{tpu_custom_call.1} parent=1 // pred_region
      %38 = vsyncadd [#allocation6], 0
      %s40 = sshll.u32 %s2, 4
      %s41 = int_to_ptr.hbm [resolvable:$true] %s40
      %s42 = sshll.u32 [#allocation7], 4
      %s43 = int_to_ptr.vmem [resolvable:$true] %s42
      %45 = dma.hbm_to_vmem [thread:$0]  %s41, 32, %s43, [#allocation6]
    $region13: #{tpu_custom_call.1} parent=1 // pred_fallthru
      _
    // Predicated region
    $region14: #{tpu_custom_call.1} parent=1 // pred_check
      _
    $region15: #{tpu_custom_call.1} parent=1 // pred_check_branch
      %47 = sbr.rel (0) target = $region17
    $region16: #{tpu_custom_call.1} parent=1 // pred_region
      %49 = dma.done [#allocation3], 128
    $region17: #{tpu_custom_call.1} parent=1 // pred_fallthru
      _
    // Predicated region
    $region18: #{tpu_custom_call.1} parent=1 // pred_check
      _
    $region19: #{tpu_custom_call.1} parent=1 // pred_check_branch
      %51 = sbr.rel (0) target = $region21
    $region20: #{tpu_custom_call.1} parent=1 // pred_region
      %53 = dma.done [#allocation6], 8192
    $region21: #{tpu_custom_call.1} parent=1 // pred_fallthru
      _
    // Predicated region
    $region22: #{tpu_custom_call.1} parent=1 // pred_check
      _
    $region23: #{tpu_custom_call.1} parent=1 // pred_check_branch
      %55 = sbr.rel (0) target = $region25
    $region24: #{tpu_custom_call.1} parent=1 // pred_region
      %57 = dma.done [#allocation6], 32
    $region25: #{tpu_custom_call.1} parent=1 // pred_fallthru
      _
    %v58 = vld [vmem:[#allocation2] sm:$0xff]
    %60 = vst [vmem:[#allocation1] ss:$4 sm:$0xff] %v58
    %v61 = vld.sshfl [vmem:[#allocation1] sm:$0xff pattern:$0x73625140]
    %v62 = vld.sshfl [vmem:[#allocation1 + $0x8] sm:$0xff pattern:$0x73625140]
    %v63 = vld.sshfl [vmem:[#allocation1 + $0x10] sm:$0xff pattern:$0x73625140]
    %v64 = vld.sshfl [vmem:[#allocation1 + $0x18] sm:$0xff pattern:$0x73625140]
    %v69 = vpack.c.bf16 %v61, %v61
    %v70 = vpack.c.bf16 %v62, %v62
    %v71 = vpack.c.bf16 %v63, %v63
    %v72 = vpack.c.bf16 %v64, %v64
    %v73 = vld [vmem:[#allocation5] sm:$0xff]
    %v74 = vld [vmem:[#allocation5 + $0x8] sm:$0xff]
    %v75 = vld [vmem:[#allocation5 + $0x10] sm:$0xff]
    %v76 = vld [vmem:[#allocation5 + $0x18] sm:$0xff]
    %v77 = vld [vmem:[#allocation5 + $0x20] sm:$0xff]
    %v78 = vld [vmem:[#allocation5 + $0x28] sm:$0xff]
    %v79 = vld [vmem:[#allocation5 + $0x30] sm:$0xff]
    %v80 = vld [vmem:[#allocation5 + $0x38] sm:$0xff]
    %v81 = vld [vmem:[#allocation5 + $0x40] sm:$0xff]
    %v82 = vld [vmem:[#allocation5 + $0x48] sm:$0xff]
    %v83 = vld [vmem:[#allocation5 + $0x50] sm:$0xff]
    %v84 = vld [vmem:[#allocation5 + $0x58] sm:$0xff]
    %v85 = vld [vmem:[#allocation5 + $0x60] sm:$0xff]
    %v86 = vld [vmem:[#allocation5 + $0x68] sm:$0xff]
    %v87 = vld [vmem:[#allocation5 + $0x70] sm:$0xff]
    %v88 = vld [vmem:[#allocation5 + $0x78] sm:$0xff]
    %v89 = vld [vmem:[#allocation5 + $0x80] sm:$0xff]
    %v90 = vld [vmem:[#allocation5 + $0x88] sm:$0xff]
    %v91 = vld [vmem:[#allocation5 + $0x90] sm:$0xff]
    %v92 = vld [vmem:[#allocation5 + $0x98] sm:$0xff]
    %v93 = vld [vmem:[#allocation5 + $0xa0] sm:$0xff]
    %v94 = vld [vmem:[#allocation5 + $0xa8] sm:$0xff]
    %v95 = vld [vmem:[#allocation5 + $0xb0] sm:$0xff]
    %v96 = vld [vmem:[#allocation5 + $0xb8] sm:$0xff]
    %v97 = vld [vmem:[#allocation5 + $0xc0] sm:$0xff]
    %v98 = vld [vmem:[#allocation5 + $0xc8] sm:$0xff]
    %v99 = vld [vmem:[#allocation5 + $0xd0] sm:$0xff]
    %v100 = vld [vmem:[#allocation5 + $0xd8] sm:$0xff]
    %v101 = vld [vmem:[#allocation5 + $0xe0] sm:$0xff]
    %v102 = vld [vmem:[#allocation5 + $0xe8] sm:$0xff]
    %v103 = vld [vmem:[#allocation5 + $0xf0] sm:$0xff]
    %v104 = vld [vmem:[#allocation5 + $0xf8] sm:$0xff]
    %v105 = vld [vmem:[#allocation5 + $0x100] sm:$0xff]
    %v106 = vld [vmem:[#allocation5 + $0x108] sm:$0xff]
    %v107 = vld [vmem:[#allocation5 + $0x110] sm:$0xff]
    %v108 = vld [vmem:[#allocation5 + $0x118] sm:$0xff]
    %v109 = vld [vmem:[#allocation5 + $0x120] sm:$0xff]
    %v110 = vld [vmem:[#allocation5 + $0x128] sm:$0xff]
    %v111 = vld [vmem:[#allocation5 + $0x130] sm:$0xff]
    %v112 = vld [vmem:[#allocation5 + $0x138] sm:$0xff]
    %v113 = vld [vmem:[#allocation5 + $0x140] sm:$0xff]
    %v114 = vld [vmem:[#allocation5 + $0x148] sm:$0xff]
    %v115 = vld [vmem:[#allocation5 + $0x150] sm:$0xff]
    %v116 = vld [vmem:[#allocation5 + $0x158] sm:$0xff]
    %v117 = vld [vmem:[#allocation5 + $0x160] sm:$0xff]
    %v118 = vld [vmem:[#allocation5 + $0x168] sm:$0xff]
    %v119 = vld [vmem:[#allocation5 + $0x170] sm:$0xff]
    %v120 = vld [vmem:[#allocation5 + $0x178] sm:$0xff]
    %v121 = vld [vmem:[#allocation5 + $0x180] sm:$0xff]
    %v122 = vld [vmem:[#allocation5 + $0x188] sm:$0xff]
    %v123 = vld [vmem:[#allocation5 + $0x190] sm:$0xff]
    %v124 = vld [vmem:[#allocation5 + $0x198] sm:$0xff]
    %v125 = vld [vmem:[#allocation5 + $0x1a0] sm:$0xff]
    %v126 = vld [vmem:[#allocation5 + $0x1a8] sm:$0xff]
    %v127 = vld [vmem:[#allocation5 + $0x1b0] sm:$0xff]
    %v128 = vld [vmem:[#allocation5 + $0x1b8] sm:$0xff]
    %v129 = vld [vmem:[#allocation5 + $0x1c0] sm:$0xff]
    %v130 = vld [vmem:[#allocation5 + $0x1c8] sm:$0xff]
    %v131 = vld [vmem:[#allocation5 + $0x1d0] sm:$0xff]
    %v132 = vld [vmem:[#allocation5 + $0x1d8] sm:$0xff]
    %v133 = vld [vmem:[#allocation5 + $0x1e0] sm:$0xff]
    %v134 = vld [vmem:[#allocation5 + $0x1e8] sm:$0xff]
    %v135 = vld [vmem:[#allocation5 + $0x1f0] sm:$0xff]
    %v136 = vld [vmem:[#allocation5 + $0x1f8] sm:$0xff]
    %v137 = vld [vmem:[#allocation7] sm:$0x3]
    %v139 = vperm.slane %v137, 0
    %v140 = vperm.slane %v137, 1
    %v207 = vunpack.c.l.b16 %v73
    %v208 = vunpack.c.h.b16 %v73
    %v209 = vunpack.c.l.b16 %v74
    %v210 = vunpack.c.h.b16 %v74
    %v211 = vunpack.c.l.b16 %v75
    %v212 = vunpack.c.h.b16 %v75
    %v213 = vunpack.c.l.b16 %v76
    %v214 = vunpack.c.h.b16 %v76
    %v215 = vunpack.c.l.b16 %v77
    %v216 = vunpack.c.h.b16 %v77
    %v217 = vunpack.c.l.b16 %v78
    %v218 = vunpack.c.h.b16 %v78
    %v219 = vunpack.c.l.b16 %v79
    %v220 = vunpack.c.h.b16 %v79
    %v221 = vunpack.c.l.b16 %v80
    %v222 = vunpack.c.h.b16 %v80
    %v223 = vunpack.c.l.b16 %v81
    %v224 = vunpack.c.h.b16 %v81
    %v225 = vunpack.c.l.b16 %v82
    %v226 = vunpack.c.h.b16 %v82
    %v227 = vunpack.c.l.b16 %v83
    %v228 = vunpack.c.h.b16 %v83
    %v229 = vunpack.c.l.b16 %v84
    %v230 = vunpack.c.h.b16 %v84
    %v231 = vunpack.c.l.b16 %v85
    %v232 = vunpack.c.h.b16 %v85
    %v233 = vunpack.c.l.b16 %v86
    %v234 = vunpack.c.h.b16 %v86
    %v235 = vunpack.c.l.b16 %v87
    %v236 = vunpack.c.h.b16 %v87
    %v237 = vunpack.c.l.b16 %v88
    %v238 = vunpack.c.h.b16 %v88
    %v239 = vunpack.c.l.b16 %v89
    %v240 = vunpack.c.h.b16 %v89
    %v241 = vunpack.c.l.b16 %v90
    %v242 = vunpack.c.h.b16 %v90
    %v243 = vunpack.c.l.b16 %v91
    %v244 = vunpack.c.h.b16 %v91
    %v245 = vunpack.c.l.b16 %v92
    %v246 = vunpack.c.h.b16 %v92
    %v247 = vunpack.c.l.b16 %v93
    %v248 = vunpack.c.h.b16 %v93
    %v249 = vunpack.c.l.b16 %v94
    %v250 = vunpack.c.h.b16 %v94
    %v251 = vunpack.c.l.b16 %v95
    %v252 = vunpack.c.h.b16 %v95
    %v253 = vunpack.c.l.b16 %v96
    %v254 = vunpack.c.h.b16 %v96
    %v255 = vunpack.c.l.b16 %v97
    %v256 = vunpack.c.h.b16 %v97
    %v257 = vunpack.c.l.b16 %v98
    %v258 = vunpack.c.h.b16 %v98
    %v259 = vunpack.c.l.b16 %v99
    %v260 = vunpack.c.h.b16 %v99
    %v261 = vunpack.c.l.b16 %v100
    %v262 = vunpack.c.h.b16 %v100
    %v263 = vunpack.c.l.b16 %v101
    %v264 = vunpack.c.h.b16 %v101
    %v265 = vunpack.c.l.b16 %v102
    %v266 = vunpack.c.h.b16 %v102
    %v267 = vunpack.c.l.b16 %v103
    %v268 = vunpack.c.h.b16 %v103
    %v269 = vunpack.c.l.b16 %v104
    %v270 = vunpack.c.h.b16 %v104
    %v271 = vunpack.c.l.b16 %v105
    %v272 = vunpack.c.h.b16 %v105
    %v273 = vunpack.c.l.b16 %v106
    %v274 = vunpack.c.h.b16 %v106
    %v275 = vunpack.c.l.b16 %v107
    %v276 = vunpack.c.h.b16 %v107
    %v277 = vunpack.c.l.b16 %v108
    %v278 = vunpack.c.h.b16 %v108
    %v279 = vunpack.c.l.b16 %v109
    %v280 = vunpack.c.h.b16 %v109
    %v281 = vunpack.c.l.b16 %v110
    %v282 = vunpack.c.h.b16 %v110
    %v283 = vunpack.c.l.b16 %v111
    %v284 = vunpack.c.h.b16 %v111
    %v285 = vunpack.c.l.b16 %v112
    %v286 = vunpack.c.h.b16 %v112
    %v287 = vunpack.c.l.b16 %v113
    %v288 = vunpack.c.h.b16 %v113
    %v289 = vunpack.c.l.b16 %v114
    %v290 = vunpack.c.h.b16 %v114
    %v291 = vunpack.c.l.b16 %v115
    %v292 = vunpack.c.h.b16 %v115
    %v293 = vunpack.c.l.b16 %v116
    %v294 = vunpack.c.h.b16 %v116
    %v295 = vunpack.c.l.b16 %v117
    %v296 = vunpack.c.h.b16 %v117
    %v297 = vunpack.c.l.b16 %v118
    %v298 = vunpack.c.h.b16 %v118
    %v299 = vunpack.c.l.b16 %v119
    %v300 = vunpack.c.h.b16 %v119
    %v301 = vunpack.c.l.b16 %v120
    %v302 = vunpack.c.h.b16 %v120
    %v303 = vunpack.c.l.b16 %v121
    %v304 = vunpack.c.h.b16 %v121
    %v305 = vunpack.c.l.b16 %v122
    %v306 = vunpack.c.h.b16 %v122
    %v307 = vunpack.c.l.b16 %v123
    %v308 = vunpack.c.h.b16 %v123
    %v309 = vunpack.c.l.b16 %v124
    %v310 = vunpack.c.h.b16 %v124
    %v311 = vunpack.c.l.b16 %v125
    %v312 = vunpack.c.h.b16 %v125
    %v313 = vunpack.c.l.b16 %v126
    %v314 = vunpack.c.h.b16 %v126
    %v315 = vunpack.c.l.b16 %v127
    %v316 = vunpack.c.h.b16 %v127
    %v317 = vunpack.c.l.b16 %v128
    %v318 = vunpack.c.h.b16 %v128
    %v319 = vunpack.c.l.b16 %v129
    %v320 = vunpack.c.h.b16 %v129
    %v321 = vunpack.c.l.b16 %v130
    %v322 = vunpack.c.h.b16 %v130
    %v323 = vunpack.c.l.b16 %v131
    %v324 = vunpack.c.h.b16 %v131
    %v325 = vunpack.c.l.b16 %v132
    %v326 = vunpack.c.h.b16 %v132
    %v327 = vunpack.c.l.b16 %v133
    %v328 = vunpack.c.h.b16 %v133
    %v329 = vunpack.c.l.b16 %v134
    %v330 = vunpack.c.h.b16 %v134
    %v331 = vunpack.c.l.b16 %v135
    %v332 = vunpack.c.h.b16 %v135
    %v333 = vunpack.c.l.b16 %v136
    %v334 = vunpack.c.h.b16 %v136
    %v335 = vpack.c.b16 %v209, %v207
    %v336 = vpack.c.b16 %v210, %v208
    %v337 = vpack.c.b16 %v213, %v211
    %v338 = vpack.c.b16 %v214, %v212
    %v339 = vpack.c.b16 %v217, %v215
    %v340 = vpack.c.b16 %v218, %v216
    %v341 = vpack.c.b16 %v221, %v219
    %v342 = vpack.c.b16 %v222, %v220
    %v343 = vpack.c.b16 %v225, %v223
    %v344 = vpack.c.b16 %v226, %v224
    %v345 = vpack.c.b16 %v229, %v227
    %v346 = vpack.c.b16 %v230, %v228
    %v347 = vpack.c.b16 %v233, %v231
    %v348 = vpack.c.b16 %v234, %v232
    %v349 = vpack.c.b16 %v237, %v235
    %v350 = vpack.c.b16 %v238, %v236
    %v351 = vpack.c.b16 %v241, %v239
    %v352 = vpack.c.b16 %v242, %v240
    %v353 = vpack.c.b16 %v245, %v243
    %v354 = vpack.c.b16 %v246, %v244
    %v355 = vpack.c.b16 %v249, %v247
    %v356 = vpack.c.b16 %v250, %v248
    %v357 = vpack.c.b16 %v253, %v251
    %v358 = vpack.c.b16 %v254, %v252
    %v359 = vpack.c.b16 %v257, %v255
    %v360 = vpack.c.b16 %v258, %v256
    %v361 = vpack.c.b16 %v261, %v259
    %v362 = vpack.c.b16 %v262, %v260
    %v363 = vpack.c.b16 %v265, %v263
    %v364 = vpack.c.b16 %v266, %v264
    %v365 = vpack.c.b16 %v269, %v267
    %v366 = vpack.c.b16 %v270, %v268
    %v367 = vpack.c.b16 %v273, %v271
    %v368 = vpack.c.b16 %v274, %v272
    %v369 = vpack.c.b16 %v277, %v275
    %v370 = vpack.c.b16 %v278, %v276
    %v371 = vpack.c.b16 %v281, %v279
    %v372 = vpack.c.b16 %v282, %v280
    %v373 = vpack.c.b16 %v285, %v283
    %v374 = vpack.c.b16 %v286, %v284
    %v375 = vpack.c.b16 %v289, %v287
    %v376 = vpack.c.b16 %v290, %v288
    %v377 = vpack.c.b16 %v293, %v291
    %v378 = vpack.c.b16 %v294, %v292
    %v379 = vpack.c.b16 %v297, %v295
    %v380 = vpack.c.b16 %v298, %v296
    %v381 = vpack.c.b16 %v301, %v299
    %v382 = vpack.c.b16 %v302, %v300
    %v383 = vpack.c.b16 %v305, %v303
    %v384 = vpack.c.b16 %v306, %v304
    %v385 = vpack.c.b16 %v309, %v307
    %v386 = vpack.c.b16 %v310, %v308
    %v387 = vpack.c.b16 %v313, %v311
    %v388 = vpack.c.b16 %v314, %v312
    %v389 = vpack.c.b16 %v317, %v315
    %v390 = vpack.c.b16 %v318, %v316
    %v391 = vpack.c.b16 %v321, %v319
    %v392 = vpack.c.b16 %v322, %v320
    %v393 = vpack.c.b16 %v325, %v323
    %v394 = vpack.c.b16 %v326, %v324
    %v395 = vpack.c.b16 %v329, %v327
    %v396 = vpack.c.b16 %v330, %v328
    %v397 = vpack.c.b16 %v333, %v331
    %v398 = vpack.c.b16 %v334, %v332
    %463 = vmatpush.bf16.msra.mxu0 %v349
    %464 = vmatpush.bf16.msra.mxu0 %v347
    %465 = vmatpush.bf16.msra.mxu0 %v345
    %466 = vmatpush.bf16.msra.mxu0 %v343
    %467 = vmatpush.bf16.msra.mxu0 %v341
    %468 = vmatpush.bf16.msra.mxu0 %v339
    %469 = vmatpush.bf16.msra.mxu0 %v337
    %470 = vmatpush.bf16.msra.mxu0 %v335
    %471 = vmatmul.bf16.gmra.mxu0 %v69
    %v472 = vpop.f32.mrf.mxu0
    %v473 = vadd.f32 %v139, %v472
    %v474 = vpop.f32.mrf.mxu0
    %475 = vdwg.mxu0
    %476 = vmatpush.bf16.msra.mxu0 %v365
    %477 = vmatpush.bf16.msra.mxu0 %v363
    %478 = vmatpush.bf16.msra.mxu0 %v361
    %479 = vmatpush.bf16.msra.mxu0 %v359
    %480 = vmatpush.bf16.msra.mxu0 %v357
    %481 = vmatpush.bf16.msra.mxu0 %v355
    %482 = vmatpush.bf16.msra.mxu0 %v353
    %483 = vmatpush.bf16.msra.mxu0 %v351
    %484 = vmatmul.bf16.gmra.mxu0 %v70
    %v485 = vpop.f32.mrf.mxu0
    %v486 = vadd.f32 %v473, %v485
    %v487 = vpop.f32.mrf.mxu0
    %488 = vdwg.mxu0
    %489 = vmatpush.bf16.msra.mxu0 %v381
    %490 = vmatpush.bf16.msra.mxu0 %v379
    %491 = vmatpush.bf16.msra.mxu0 %v377
    %492 = vmatpush.bf16.msra.mxu0 %v375
    %493 = vmatpush.bf16.msra.mxu0 %v373
    %494 = vmatpush.bf16.msra.mxu0 %v371
    %495 = vmatpush.bf16.msra.mxu0 %v369
    %496 = vmatpush.bf16.msra.mxu0 %v367
    %497 = vmatmul.bf16.gmra.mxu0 %v71
    %v498 = vpop.f32.mrf.mxu0
    %v499 = vadd.f32 %v486, %v498
    %v500 = vpop.f32.mrf.mxu0
    %501 = vdwg.mxu0
    %502 = vmatpush.bf16.msra.mxu0 %v397
    %503 = vmatpush.bf16.msra.mxu0 %v395
    %504 = vmatpush.bf16.msra.mxu0 %v393
    %505 = vmatpush.bf16.msra.mxu0 %v391
    %506 = vmatpush.bf16.msra.mxu0 %v389
    %507 = vmatpush.bf16.msra.mxu0 %v387
    %508 = vmatpush.bf16.msra.mxu0 %v385
    %509 = vmatpush.bf16.msra.mxu0 %v383
    %510 = vmatmul.bf16.gmra.mxu0 %v72
    %v511 = vpop.f32.mrf.mxu0
    %v512 = vadd.f32 %v499, %v511
    %v513 = vpop.f32.mrf.mxu0
    %514 = vdwg.mxu0
    %515 = vmatpush.bf16.msra.mxu0 %v350
    %516 = vmatpush.bf16.msra.mxu0 %v348
    %517 = vmatpush.bf16.msra.mxu0 %v346
    %518 = vmatpush.bf16.msra.mxu0 %v344
    %519 = vmatpush.bf16.msra.mxu0 %v342
    %520 = vmatpush.bf16.msra.mxu0 %v340
    %521 = vmatpush.bf16.msra.mxu0 %v338
    %522 = vmatpush.bf16.msra.mxu0 %v336
    %523 = vmatmul.bf16.gmra.mxu0 %v69
    %v524 = vpop.f32.mrf.mxu0
    %v525 = vadd.f32 %v140, %v524
    %v526 = vpop.f32.mrf.mxu0
    %527 = vdwg.mxu0
    %528 = vmatpush.bf16.msra.mxu0 %v366
    %529 = vmatpush.bf16.msra.mxu0 %v364
    %530 = vmatpush.bf16.msra.mxu0 %v362
    %531 = vmatpush.bf16.msra.mxu0 %v360
    %532 = vmatpush.bf16.msra.mxu0 %v358
    %533 = vmatpush.bf16.msra.mxu0 %v356
    %534 = vmatpush.bf16.msra.mxu0 %v354
    %535 = vmatpush.bf16.msra.mxu0 %v352
    %536 = vmatmul.bf16.gmra.mxu0 %v70
    %v537 = vpop.f32.mrf.mxu0
    %v538 = vadd.f32 %v525, %v537
    %v539 = vpop.f32.mrf.mxu0
    %540 = vdwg.mxu0
    %541 = vmatpush.bf16.msra.mxu0 %v382
    %542 = vmatpush.bf16.msra.mxu0 %v380
    %543 = vmatpush.bf16.msra.mxu0 %v378
    %544 = vmatpush.bf16.msra.mxu0 %v376
    %545 = vmatpush.bf16.msra.mxu0 %v374
    %546 = vmatpush.bf16.msra.mxu0 %v372
    %547 = vmatpush.bf16.msra.mxu0 %v370
    %548 = vmatpush.bf16.msra.mxu0 %v368
    %549 = vmatmul.bf16.gmra.mxu0 %v71
    %v550 = vpop.f32.mrf.mxu0
    %v551 = vadd.f32 %v538, %v550
    %v552 = vpop.f32.mrf.mxu0
    %553 = vdwg.mxu0
    %554 = vmatpush.bf16.msra.mxu0 %v398
    %555 = vmatpush.bf16.msra.mxu0 %v396
    %556 = vmatpush.bf16.msra.mxu0 %v394
    %557 = vmatpush.bf16.msra.mxu0 %v392
    %558 = vmatpush.bf16.msra.mxu0 %v390
    %559 = vmatpush.bf16.msra.mxu0 %v388
    %560 = vmatpush.bf16.msra.mxu0 %v386
    %561 = vmatpush.bf16.msra.mxu0 %v384
    %562 = vmatmul.bf16.gmra.mxu0 %v72
    %v563 = vpop.f32.mrf.mxu0
    %v564 = vadd.f32 %v551, %v563
    %v565 = vpop.f32.mrf.mxu0
    %566 = vdwg.mxu0
    %v569 = vrot.slane %v564, 7
    %vm570 = vcmask 1040384
    %v571 = vsel %vm570, %v512, %v569
    %vm572 = vcmask 1041409
    %v573 = vsel %vm572, %v512, %v569
    %v574 = vrot.slane %v573, 1
    %v577 = vlaneseq
    %vm578 = vcmp.ge.s32.totalorder %v577, 0
    %vm579 = vcmp.lt.s32.totalorder %v577, 256
    %vm580 = vmand %vm578, %vm579
    %581 = vst.msk [vmem:[#allocation8] sm:$0x3] %vm580, %v571
    %582 = vst.msk [vmem:[#allocation8 + $0x2] sm:$0x3] %vm580, %v574
    // Predicated region
    $region26: #{tpu_custom_call.1} parent=1 // pred_check
      _
    $region27: #{tpu_custom_call.1} parent=1 // pred_check_branch
      %584 = sbr.rel (0) target = $region29
    $region28: #{tpu_custom_call.1} parent=1 // pred_region
      %586 = vsyncadd [#allocation4], 0
      %s587 = sshll.u32 [#allocation8], 4
      %s588 = int_to_ptr.vmem [resolvable:$true] %s587
      %s589 = sshll.u32 %s3, 4
      %s590 = int_to_ptr.hbm [resolvable:$true] %s589
      %595 = dma.vmem_to_hbm [thread:$0]  %s588, 64, %s590, [#allocation4], 32, 32, 2
    $region29: #{tpu_custom_call.1} parent=1 // pred_fallthru
      _
    // Predicated region
    $region30: #{tpu_custom_call.1} parent=1 // pred_check
      _
    $region31: #{tpu_custom_call.1} parent=1 // pred_check_branch
      %597 = sbr.rel (0) target = $region33
    $region32: #{tpu_custom_call.1} parent=1 // pred_region
      %599 = dma.done [#allocation4], 64
    $region33: #{tpu_custom_call.1} parent=1 // pred_fallthru
      _
    %600 = vsyncpa [#allocation3], 1
    %601 = vsyncpa [#allocation6], 1
    %602 = vsyncpa [#allocation4], 1

</llo_original>
